<compile_context>
chip_gen: v7x
topology: tpu7x:2x2x1
jax: 0.10.0
libtpu: 0.0.40
codegen_flags: <defaults>
</compile_context>

<pallas_src>
import functools

import jax
import jax.numpy as jnp
from jax import lax
from jax.experimental import pallas as pl
from jax.experimental.pallas import tpu as pltpu


def _conv_gn_relu_kernel(x_ref, w_ref, g_ref, b_ref, mask_ref, gmix_ref, o_ref,
                         *, H, W, KH, KW, Wp, cpg, eps, act):
    """One (batch element, Cout group-tile) per grid step.

    x_ref:    (1, Cin_p, L)          bf16 zero-padded input, spatial dims
                                     flattened with row pitch Wp = W + KW - 1.
    w_ref:    (KH, Co_t, KW*Cin_p)   bf16 conv weights; per-kh slab is a
                                     leading-axis slice, K ordered (kw, cin).
    g_ref:    (Co_t, 1)              GroupNorm gamma (fp32).
    b_ref:    (Co_t, 1)              GroupNorm beta (fp32).
    mask_ref: (1, Mq)                1.0 for valid output columns, 0.0 for the
                                     (KW-1) padding columns of each image row.
    gmix_ref: (Co_t, Co_t)           0/1 group-membership matrix (tile-local;
                                     tiles are group aligned).
    o_ref:    (1, Co_t, Mq)          output, Mq = H*Wp (pad cols cropped in
                                     the wrapper).
    """
    Mq = H * Wp
    cin_p = x_ref.shape[1]

    # ---- convolution: accumulate over kh, stack only the KW taps ----------
    # tap (kh, kw) of output position j = h*Wp + w reads flat index j + s,
    # s = kh*Wp + kw  ->  each tap is a shifted lane-window of the flat input.
    acc = None
    for kh in range(KH):
        taps = jnp.concatenate(
            [x_ref[0, :, kh * Wp + kw: kh * Wp + kw + Mq] for kw in range(KW)],
            axis=0)                                   # (KW*Cin_p, Mq) bf16
        part = lax.dot_general(
            w_ref[kh], taps,
            dimension_numbers=(((1,), (0,)), ((), ())),
            preferred_element_type=jnp.float32)       # (Co_t, Mq) fp32
        acc = part if acc is None else acc + part
    # TODO(synk): switch to per-tap accumulation (K = Cin_p, no kw-stack) once
    # Cin_p grows large enough that the stacked slab dominates VMEM.

    # ---- GroupNorm statistics over valid pixels ---------------------------
    # Only `am` stays live below: stats, affine and ReLU all read it, and the
    # garbage columns it zeroes are cropped in the wrapper anyway.
    am = acc * mask_ref[...]                          # (Co_t, Mq) fp32
    ssum = jnp.sum(am, axis=1, keepdims=True)         # (Co_t, 1)
    ssq = jnp.sum(am * am, axis=1, keepdims=True)     # (Co_t, 1)
    # per-group sums broadcast back to every channel of the group.
    gsum = jnp.dot(gmix_ref[...], ssum, preferred_element_type=jnp.float32)
    gsq = jnp.dot(gmix_ref[...], ssq, preferred_element_type=jnp.float32)

    inv_cnt = 1.0 / float(H * W * cpg)
    mean = gsum * inv_cnt
    # TODO(synk): E[x^2]-mean^2 (clamped) is fine in fp32 for conv outputs; use
    # a shifted / two-pass variance if activations ever get a large DC offset.
    var = jnp.maximum(gsq * inv_cnt - mean * mean, 0.0)
    inv = lax.rsqrt(var + jnp.float32(eps))

    # fused affine epilogue: y = am * scale + shift (then ReLU)
    scale = g_ref[...] * inv                          # (Co_t, 1)
    shift = b_ref[...] - mean * scale                 # (Co_t, 1)
    y = am * scale + shift
    if act:
        y = jnp.maximum(y, 0.0)
    o_ref[0, :, :] = y.astype(o_ref.dtype)


def conv_gn_relu(x_nchw, w_oihw, gamma, beta, *, num_groups=16, eps=1e-5,
                 act=True, co_tile=None, mxu_dtype=jnp.bfloat16,
                 out_dtype=None):
    """Forward pass of the PyTorch `Conv` module (GN variant, stride=1)."""
    N, Cin, H, W = x_nchw.shape
    Cout, Cin_w, KH, KW = w_oihw.shape
    assert Cin_w == Cin
    assert KH == KW and KH % 2 == 1, "only odd square kernels, stride=1"
    assert Cout % num_groups == 0, "GroupNorm needs Cout % num_groups == 0"
    # TODO(synk): stride != 1 and norm='BN'/'SyncBN' variants of the module
    # are not implemented (module defaults: k=3, stride=1, GN).
    pad = (KH - 1) // 2
    cpg = Cout // num_groups

    # Cout tiling: group aligned so GN stats stay local to a tile.
    if co_tile is None:
        co_tile = Cout
    assert Cout % co_tile == 0 and co_tile % 8 == 0 and co_tile % cpg == 0
    n_co = Cout // co_tile

    cin_p = ((Cin + 7) // 8) * 8       # sublane-align the channel axis
    Wp = W + KW - 1                    # row pitch of padded, flattened image
    Mq = H * Wp                        # output columns (incl. padding cols)
    Hp = H + KH                        # +1 extra bottom row keeps every tap
                                       # window of the garbage cols in bounds
    L = Hp * Wp

    out_dtype = out_dtype or x_nchw.dtype

    # bf16 MXU operands; accumulation stays fp32 inside the kernel.
    # TODO(synk): fuse the halo pad / final column crop into the kernel (row
    # tiling with in-kernel halo + valid-column stores) to drop these extra
    # HBM passes at production resolutions; at the test shape a whole sample
    # fits VMEM comfortably.
    xb = x_nchw.astype(mxu_dtype)
    xp = jnp.pad(xb, ((0, 0), (0, cin_p - Cin), (pad, pad + 1), (pad, pad)))
    x_flat = xp.reshape(N, cin_p, L)

    # (KH, Cout, KW*Cin_p) weights; K ordered (kw, cin) to match the kw-stack.
    wp = jnp.pad(w_oihw, ((0, 0), (0, cin_p - Cin), (0, 0), (0, 0)))
    w3 = jnp.transpose(wp, (2, 0, 3, 1)).reshape(KH, Cout, KW * cin_p)
    w3 = w3.astype(mxu_dtype)

    g2 = gamma.reshape(Cout, 1).astype(jnp.float32)
    b2 = beta.reshape(Cout, 1).astype(jnp.float32)

    cols = jnp.arange(Mq, dtype=jnp.int32)
    mask = ((cols % Wp) < W).astype(jnp.float32).reshape(1, Mq)

    # Tile-local group-mixing matrix (identical for every group-aligned tile).
    gid = jnp.arange(co_tile, dtype=jnp.int32) // cpg
    gmix = (gid[:, None] == gid[None, :]).astype(jnp.float32)

    kernel = functools.partial(_conv_gn_relu_kernel, H=H, W=W, KH=KH, KW=KW,
                               Wp=Wp, cpg=cpg, eps=eps, act=act)

    out = pl.pallas_call(
        kernel,
        out_shape=jax.ShapeDtypeStruct((N, Cout, Mq), out_dtype),
        grid_spec=pltpu.PrefetchScalarGridSpec(
            num_scalar_prefetch=0,
            # inner axis = Cout tiles -> the input block index is unchanged
            # across it, so the sample slab is not re-DMA'd per Cout tile.
            grid=(N, n_co),
            in_specs=[
                pl.BlockSpec((1, cin_p, L), lambda n, c: (n, 0, 0)),
                pl.BlockSpec((KH, co_tile, KW * cin_p), lambda n, c: (0, c, 0)),
                pl.BlockSpec((co_tile, 1), lambda n, c: (c, 0)),
                pl.BlockSpec((co_tile, 1), lambda n, c: (c, 0)),
                pl.BlockSpec((1, Mq), lambda n, c: (0, 0)),
                pl.BlockSpec((co_tile, co_tile), lambda n, c: (0, 0)),
            ],
            out_specs=pl.BlockSpec((1, co_tile, Mq), lambda n, c: (n, c, 0)),
        ),
        compiler_params=pltpu.CompilerParams(
            dimension_semantics=("parallel", "parallel"),
            vmem_limit_bytes=48 * 1024 * 1024),
    )(x_flat, w3, g2, b2, mask, gmix)

    # strip the (KW-1) garbage columns per image row; reshape is free.
    out = out.reshape(N, Cout, H, Wp)[:, :, :, :W]
    return out


def reference(x, w, gamma, beta, *, num_groups=16, eps=1e-5, act=True):
    out = jax.lax.conv_general_dilated(
        x, w, window_strides=(1, 1), padding="SAME",
        dimension_numbers=("NCHW", "OIHW", "NCHW"))
    N, C, H, W = out.shape
    o = out.reshape(N, num_groups, C // num_groups, H, W)
    mean = o.mean(axis=(2, 3, 4), keepdims=True)
    var = o.var(axis=(2, 3, 4), keepdims=True)
    o = (o - mean) / jnp.sqrt(var + eps)
    o = o.reshape(N, C, H, W)
    o = o * gamma[None, :, None, None] + beta[None, :, None, None]
    if act:
        o = jnp.maximum(o, 0.0)
    return o


if __name__ == "__main__":
    # Module config: n_in=4, n_out=32 (divisible by 16 groups), k=3, stride=1, GN.
    N, Cin, H, W = 2, 4, 16, 16
    Cout = 32

    key = jax.random.PRNGKey(0)
    kx, kw_, kg, kb = jax.random.split(key, 4)
    x = jax.random.normal(kx, (N, Cin, H, W), dtype=jnp.float32)
    w = jax.random.normal(kw_, (Cout, Cin, 3, 3), dtype=jnp.float32) * 0.1
    gamma = 1.0 + 0.1 * jax.random.normal(kg, (Cout,), dtype=jnp.float32)
    beta = 0.1 * jax.random.normal(kb, (Cout,), dtype=jnp.float32)

    # co_tile=16 exercises the group-aligned Cout tiling path (grid = 2x2).
    out = conv_gn_relu(x, w, gamma, beta, num_groups=16, act=True, co_tile=16)
    out = jax.block_until_ready(out)
    assert out.shape == (N, Cout, H, W), out.shape

    # bf16-consistent reference (same rounded conv operands, fp32 accumulation
    # and GN) -> tight check on the kernel math.
    ref_bf = reference(x.astype(jnp.bfloat16).astype(jnp.float32),
                       w.astype(jnp.bfloat16).astype(jnp.float32),
                       gamma, beta, num_groups=16, act=True)
    err_bf = float(jnp.max(jnp.abs(out - ref_bf)))
    assert jnp.allclose(out, ref_bf, rtol=5e-3, atol=5e-3), err_bf

    # fp32 reference sanity check (difference = bf16 MXU operand rounding).
    ref_f32 = reference(x, w, gamma, beta, num_groups=16, act=True)
    err_f32 = float(jnp.max(jnp.abs(out - ref_f32)))
    assert jnp.allclose(out, ref_f32, rtol=5e-2, atol=5e-2), err_f32

    print("KERNEL_OK")
</pallas_src>

<mosaic_0001>
module attributes {stable_mosaic.version = 11 : i64} {
  func.func @_conv_gn_relu_kernel(%arg0: i32, %arg1: i32, %arg2: memref<1x8x342xbf16, #tpu.memory_space<vmem>>, %arg3: memref<3x16x24xbf16, #tpu.memory_space<vmem>>, %arg4: memref<16x1xf32, #tpu.memory_space<vmem>>, %arg5: memref<16x1xf32, #tpu.memory_space<vmem>>, %arg6: memref<1x288xf32, #tpu.memory_space<vmem>>, %arg7: memref<16x16xf32, #tpu.memory_space<vmem>>, %arg8: memref<1x16x288xf32, #tpu.memory_space<vmem>>) attributes {dimension_semantics = [#tpu.dimension_semantics<parallel>, #tpu.dimension_semantics<parallel>], iteration_bounds = array<i64: 2, 2>, scalar_prefetch = 0 : i64, scratch_operands = 0 : i64, tpu.core_type = #tpu.core_type<tc>, window_params = [{transform_indices = @transform_0, window_bounds = array<i64: 1, 8, 342>}, {transform_indices = @transform_1, window_bounds = array<i64: 3, 16, 24>}, {transform_indices = @transform_2, window_bounds = array<i64: 16, 1>}, {transform_indices = @transform_3, window_bounds = array<i64: 16, 1>}, {pipeline_mode = #tpu.pipeline_mode<synchronous>, transform_indices = @transform_4, window_bounds = array<i64: 1, 288>}, {pipeline_mode = #tpu.pipeline_mode<synchronous>, transform_indices = @transform_5, window_bounds = array<i64: 16, 16>}, {transform_indices = @transform_6, window_bounds = array<i64: 1, 16, 288>}]} {
    %c0 = arith.constant 0 : index
    %c0_0 = arith.constant 0 : index
    %c0_1 = arith.constant 0 : index
    %0 = vector.load %arg2[%c0, %c0_0, %c0_1] : memref<1x8x342xbf16, #tpu.memory_space<vmem>>, vector<1x8x288xbf16>
    %1 = vector.shape_cast %0 : vector<1x8x288xbf16> to vector<8x288xbf16>
    %c0_2 = arith.constant 0 : index
    %c0_3 = arith.constant 0 : index
    %c1 = arith.constant 1 : index
    %2 = vector.load %arg2[%c0_2, %c0_3, %c1] : memref<1x8x342xbf16, #tpu.memory_space<vmem>>, vector<1x8x288xbf16>
    %3 = vector.shape_cast %2 : vector<1x8x288xbf16> to vector<8x288xbf16>
    %c0_4 = arith.constant 0 : index
    %c0_5 = arith.constant 0 : index
    %c2 = arith.constant 2 : index
    %4 = vector.load %arg2[%c0_4, %c0_5, %c2] : memref<1x8x342xbf16, #tpu.memory_space<vmem>>, vector<1x8x288xbf16>
    %5 = vector.shape_cast %4 : vector<1x8x288xbf16> to vector<8x288xbf16>
    %6 = tpu.concatenate %1, %3, %5 in 0 : vector<8x288xbf16>, vector<8x288xbf16>, vector<8x288xbf16> -> vector<24x288xbf16>
    %c0_6 = arith.constant 0 : index
    %c0_7 = arith.constant 0 : index
    %c0_8 = arith.constant 0 : index
    %7 = vector.load %arg3[%c0_6, %c0_7, %c0_8] : memref<3x16x24xbf16, #tpu.memory_space<vmem>>, vector<1x16x24xbf16>
    %8 = vector.shape_cast %7 : vector<1x16x24xbf16> to vector<16x24xbf16>
    %cst = arith.constant dense<0.000000e+00> : vector<16x288xf32>
    %9 = tpu.matmul %8, %6, %cst {dimension_numbers = #tpu.dot_dimension_numbers<[1], [0], [0], [1], [0, 0, 1, 1], [], []>} : vector<16x24xbf16>, vector<24x288xbf16>, vector<16x288xf32> -> vector<16x288xf32>
    %c0_9 = arith.constant 0 : index
    %c0_10 = arith.constant 0 : index
    %c18 = arith.constant 18 : index
    %10 = vector.load %arg2[%c0_9, %c0_10, %c18] : memref<1x8x342xbf16, #tpu.memory_space<vmem>>, vector<1x8x288xbf16>
    %11 = vector.shape_cast %10 : vector<1x8x288xbf16> to vector<8x288xbf16>
    %c0_11 = arith.constant 0 : index
    %c0_12 = arith.constant 0 : index
    %c19 = arith.constant 19 : index
    %12 = vector.load %arg2[%c0_11, %c0_12, %c19] : memref<1x8x342xbf16, #tpu.memory_space<vmem>>, vector<1x8x288xbf16>
    %13 = vector.shape_cast %12 : vector<1x8x288xbf16> to vector<8x288xbf16>
    %c0_13 = arith.constant 0 : index
    %c0_14 = arith.constant 0 : index
    %c20 = arith.constant 20 : index
    %14 = vector.load %arg2[%c0_13, %c0_14, %c20] : memref<1x8x342xbf16, #tpu.memory_space<vmem>>, vector<1x8x288xbf16>
    %15 = vector.shape_cast %14 : vector<1x8x288xbf16> to vector<8x288xbf16>
    %16 = tpu.concatenate %11, %13, %15 in 0 : vector<8x288xbf16>, vector<8x288xbf16>, vector<8x288xbf16> -> vector<24x288xbf16>
    %c1_15 = arith.constant 1 : index
    %c0_16 = arith.constant 0 : index
    %c0_17 = arith.constant 0 : index
    %17 = vector.load %arg3[%c1_15, %c0_16, %c0_17] : memref<3x16x24xbf16, #tpu.memory_space<vmem>>, vector<1x16x24xbf16>
    %18 = vector.shape_cast %17 : vector<1x16x24xbf16> to vector<16x24xbf16>
    %cst_18 = arith.constant dense<0.000000e+00> : vector<16x288xf32>
    %19 = tpu.matmul %18, %16, %cst_18 {dimension_numbers = #tpu.dot_dimension_numbers<[1], [0], [0], [1], [0, 0, 1, 1], [], []>} : vector<16x24xbf16>, vector<24x288xbf16>, vector<16x288xf32> -> vector<16x288xf32>
    %20 = arith.addf %9, %19 : vector<16x288xf32>
    %c0_19 = arith.constant 0 : index
    %c0_20 = arith.constant 0 : index
    %c36 = arith.constant 36 : index
    %21 = vector.load %arg2[%c0_19, %c0_20, %c36] : memref<1x8x342xbf16, #tpu.memory_space<vmem>>, vector<1x8x288xbf16>
    %22 = vector.shape_cast %21 : vector<1x8x288xbf16> to vector<8x288xbf16>
    %c0_21 = arith.constant 0 : index
    %c0_22 = arith.constant 0 : index
    %c37 = arith.constant 37 : index
    %23 = vector.load %arg2[%c0_21, %c0_22, %c37] : memref<1x8x342xbf16, #tpu.memory_space<vmem>>, vector<1x8x288xbf16>
    %24 = vector.shape_cast %23 : vector<1x8x288xbf16> to vector<8x288xbf16>
    %c0_23 = arith.constant 0 : index
    %c0_24 = arith.constant 0 : index
    %c38 = arith.constant 38 : index
    %25 = vector.load %arg2[%c0_23, %c0_24, %c38] : memref<1x8x342xbf16, #tpu.memory_space<vmem>>, vector<1x8x288xbf16>
    %26 = vector.shape_cast %25 : vector<1x8x288xbf16> to vector<8x288xbf16>
    %27 = tpu.concatenate %22, %24, %26 in 0 : vector<8x288xbf16>, vector<8x288xbf16>, vector<8x288xbf16> -> vector<24x288xbf16>
    %c2_25 = arith.constant 2 : index
    %c0_26 = arith.constant 0 : index
    %c0_27 = arith.constant 0 : index
    %28 = vector.load %arg3[%c2_25, %c0_26, %c0_27] : memref<3x16x24xbf16, #tpu.memory_space<vmem>>, vector<1x16x24xbf16>
    %29 = vector.shape_cast %28 : vector<1x16x24xbf16> to vector<16x24xbf16>
    %cst_28 = arith.constant dense<0.000000e+00> : vector<16x288xf32>
    %30 = tpu.matmul %29, %27, %cst_28 {dimension_numbers = #tpu.dot_dimension_numbers<[1], [0], [0], [1], [0, 0, 1, 1], [], []>} : vector<16x24xbf16>, vector<24x288xbf16>, vector<16x288xf32> -> vector<16x288xf32>
    %31 = arith.addf %20, %30 : vector<16x288xf32>
    %c0_29 = arith.constant 0 : index
    %c0_30 = arith.constant 0 : index
    %32 = vector.load %arg6[%c0_29, %c0_30] : memref<1x288xf32, #tpu.memory_space<vmem>>, vector<1x288xf32>
    %33 = vector.broadcast %32 : vector<1x288xf32> to vector<16x288xf32>
    %34 = arith.mulf %31, %33 : vector<16x288xf32>
    %cst_31 = arith.constant dense<0.000000e+00> : vector<16xf32>
    %35 = vector.multi_reduction <add>, %34, %cst_31 [1] : vector<16x288xf32> to vector<16xf32>
    %36 = vector.shape_cast %35 : vector<16xf32> to vector<16x1xf32>
    %37 = arith.mulf %34, %34 : vector<16x288xf32>
    %cst_32 = arith.constant dense<0.000000e+00> : vector<16xf32>
    %38 = vector.multi_reduction <add>, %37, %cst_32 [1] : vector<16x288xf32> to vector<16xf32>
    %39 = vector.shape_cast %38 : vector<16xf32> to vector<16x1xf32>
    %c0_33 = arith.constant 0 : index
    %c0_34 = arith.constant 0 : index
    %40 = vector.load %arg7[%c0_33, %c0_34] : memref<16x16xf32, #tpu.memory_space<vmem>>, vector<16x16xf32>
    %cst_35 = arith.constant dense<0.000000e+00> : vector<16x1xf32>
    %41 = tpu.matmul %40, %36, %cst_35 {dimension_numbers = #tpu.dot_dimension_numbers<[1], [0], [0], [1], [0, 0, 1, 1], [], []>} : vector<16x16xf32>, vector<16x1xf32>, vector<16x1xf32> -> vector<16x1xf32>
    %c0_36 = arith.constant 0 : index
    %c0_37 = arith.constant 0 : index
    %42 = vector.load %arg7[%c0_36, %c0_37] : memref<16x16xf32, #tpu.memory_space<vmem>>, vector<16x16xf32>
    %cst_38 = arith.constant dense<0.000000e+00> : vector<16x1xf32>
    %43 = tpu.matmul %42, %39, %cst_38 {dimension_numbers = #tpu.dot_dimension_numbers<[1], [0], [0], [1], [0, 0, 1, 1], [], []>} : vector<16x16xf32>, vector<16x1xf32>, vector<16x1xf32> -> vector<16x1xf32>
    %cst_39 = arith.constant 0.001953125 : f32
    %44 = vector.broadcast %cst_39 : f32 to vector<16x1xf32>
    %45 = arith.mulf %41, %44 : vector<16x1xf32>
    %cst_40 = arith.constant 0.001953125 : f32
    %46 = vector.broadcast %cst_40 : f32 to vector<16x1xf32>
    %47 = arith.mulf %43, %46 : vector<16x1xf32>
    %48 = arith.mulf %45, %45 : vector<16x1xf32>
    %49 = arith.subf %47, %48 : vector<16x1xf32>
    %cst_41 = arith.constant 0.000000e+00 : f32
    %50 = vector.broadcast %cst_41 : f32 to vector<16x1xf32>
    %51 = arith.maximumf %49, %50 : vector<16x1xf32>
    %cst_42 = arith.constant 9.99999974E-6 : f32
    %52 = vector.broadcast %cst_42 : f32 to vector<16x1xf32>
    %53 = arith.addf %51, %52 : vector<16x1xf32>
    %54 = math.rsqrt %53 : vector<16x1xf32>
    %c0_43 = arith.constant 0 : index
    %c0_44 = arith.constant 0 : index
    %55 = vector.load %arg4[%c0_43, %c0_44] : memref<16x1xf32, #tpu.memory_space<vmem>>, vector<16x1xf32>
    %56 = arith.mulf %55, %54 : vector<16x1xf32>
    %c0_45 = arith.constant 0 : index
    %c0_46 = arith.constant 0 : index
    %57 = vector.load %arg5[%c0_45, %c0_46] : memref<16x1xf32, #tpu.memory_space<vmem>>, vector<16x1xf32>
    %58 = arith.mulf %45, %56 : vector<16x1xf32>
    %59 = arith.subf %57, %58 : vector<16x1xf32>
    %60 = vector.broadcast %56 : vector<16x1xf32> to vector<16x288xf32>
    %61 = arith.mulf %34, %60 : vector<16x288xf32>
    %62 = vector.broadcast %59 : vector<16x1xf32> to vector<16x288xf32>
    %63 = arith.addf %61, %62 : vector<16x288xf32>
    %cst_47 = arith.constant 0.000000e+00 : f32
    %64 = vector.broadcast %cst_47 : f32 to vector<16x288xf32>
    %65 = arith.maximumf %63, %64 : vector<16x288xf32>
    %c0_48 = arith.constant 0 : index
    %c0_49 = arith.constant 0 : index
    %c0_50 = arith.constant 0 : index
    %66 = vector.load %arg8[%c0_48, %c0_49, %c0_50] : memref<1x16x288xf32, #tpu.memory_space<vmem>>, vector<1x16x288xf32>
    %67 = vector.shape_cast %66 : vector<1x16x288xf32> to vector<16x288xf32>
    %68 = vector.shape_cast %65 : vector<16x288xf32> to vector<1x16x288xf32>
    tpu.vector_store %arg8[%c0_48, %c0_49, %c0_50], %68 {strides = array<i32>} : memref<1x16x288xf32, #tpu.memory_space<vmem>>, vector<1x16x288xf32>,
    return
  }
  func.func @transform_0(%arg0: i32, %arg1: i32) -> (i32, i32, i32) {
    %c0_i32 = arith.constant 0 : i32
    %c0_i32_0 = arith.constant 0 : i32
    %c0_i32_1 = arith.constant 0 : i32
    return %arg0, %c0_i32, %c0_i32_0 : i32, i32, i32
  }
  func.func @transform_1(%arg0: i32, %arg1: i32) -> (i32, i32, i32) {
    %c0_i32 = arith.constant 0 : i32
    %c0_i32_0 = arith.constant 0 : i32
    %c0_i32_1 = arith.constant 0 : i32
    return %c0_i32, %arg1, %c0_i32_0 : i32, i32, i32
  }
  func.func @transform_2(%arg0: i32, %arg1: i32) -> (i32, i32) {
    %c0_i32 = arith.constant 0 : i32
    %c0_i32_0 = arith.constant 0 : i32
    return %arg1, %c0_i32 : i32, i32
  }
  func.func @transform_3(%arg0: i32, %arg1: i32) -> (i32, i32) {
    %c0_i32 = arith.constant 0 : i32
    %c0_i32_0 = arith.constant 0 : i32
    return %arg1, %c0_i32 : i32, i32
  }
  func.func @transform_4(%arg0: i32, %arg1: i32) -> (i32, i32) {
    %c0_i32 = arith.constant 0 : i32
    %c0_i32_0 = arith.constant 0 : i32
    %c0_i32_1 = arith.constant 0 : i32
    return %c0_i32, %c0_i32_0 : i32, i32
  }
  func.func @transform_5(%arg0: i32, %arg1: i32) -> (i32, i32) {
    %c0_i32 = arith.constant 0 : i32
    %c0_i32_0 = arith.constant 0 : i32
    %c0_i32_1 = arith.constant 0 : i32
    return %c0_i32, %c0_i32_0 : i32, i32
  }
  func.func @transform_6(%arg0: i32, %arg1: i32) -> (i32, i32, i32) {
    %c0_i32 = arith.constant 0 : i32
    %c0_i32_0 = arith.constant 0 : i32
    return %arg0, %arg1, %c0_i32 : i32, i32, i32
  }
}

</mosaic_0001>

<llo_original>
// kernel: tpu_custom_call.1
$region0: #{tpu_custom_call.1}
  #allocation0 [shape = 'u32[]', space=smem, size = 0x4, offset = 0x4, fixed_abs, tag = 'smem constant byte address 0x4 - core index']
  #allocation1 [shape = 'u32[144,128]{1,0:T(1,128)}', space=vmem, size = 0x12000, scoped, tag = 'internal scratch']
  %s0 = inlined_call_operand.vmem [shape: bf16[2,8,342], index: 0, kind: input, shape index: {}]
  %s1 = inlined_call_operand.vmem [shape: bf16[3,32,24], index: 1, kind: input, shape index: {}]
  %s2 = inlined_call_operand.vmem [shape: f32[32,1], index: 2, kind: input, shape index: {}]
  %s3 = inlined_call_operand.vmem [shape: f32[32,1], index: 3, kind: input, shape index: {}]
  %s4 = inlined_call_operand.vmem [shape: f32[1,288], index: 4, kind: input, shape index: {}]
  %s5 = inlined_call_operand.vmem [shape: f32[16,16], index: 5, kind: input, shape index: {}]
  %s6 = inlined_call_operand.hbm [shape: f32[2,32,288], index: 6, kind: output, shape index: {}]
  %s7 = sld [smem:[#allocation0]]
  $region98: #{tpu_custom_call.1} parent=0
    _
  %s9 = ssub.s32 1, %s7
  %s10 = scalar_select 0, %s9, %s7
  $region1: #{tpu_custom_call.1} parent=0
    #allocation2 [shape = 'u8[24576]{0}', space=vmem, size = 0x6000, scoped, tag = 'input window, operand 1']
    #allocation3 [shape = 'u8[49152]{0}', space=vmem, size = 0xc000, scoped, tag = 'output window, operand 0']
    #allocation4 [shape = 's32[2]{0}', space=sflag, size = 0x8, scoped, tag = 'scoped memory for tpu_custom_call.1']
    %11 = vsyncpa [#allocation4], 0
    %s12 = scalar_lea.sflag [#allocation4], 1
    %13 = vsyncpa %s12, 0
    loop: start=0, step=1, limit=6
    $region2: #{tpu_custom_call.1} parent=1 // loop_pre_header
      _
    $region3: #{tpu_custom_call.1} parent=1 // loop_header
      %s15 = sphi 0, %s19
      %p16 = scmp.ge.s32.totalorder %s15, 6
      %s22 = sphi 0, %s34
      %s23 = sphi 0, %s30
      %s24 = sphi 0, %s22
      %s25 = sphi 0, %s23
      %s26 = sphi 0, %s24
      %s27 = sphi 0, %s25
      %s37 = sphi 0, %s39
      %s40 = sphi 0, %s37
      %s41 = sphi 0, %s40
      %s57 = sphi 0, %s41
      %s63 = sphi 0, %s65
      %s66 = sphi 0, %s63
      %s67 = sphi 0, %s66
      %s83 = sphi 0, %s67
      %s89 = sphi 0, %s91
      %s92 = sphi 0, %s89
      %s93 = sphi 0, %s92
      %s109 = sphi 0, %s93
      %s115 = sphi 0, %s117
      %s118 = sphi 0, %s115
      %s119 = sphi 0, %s118
      %s135 = sphi 0, %s119
      %s139 = sphi 0, %s139
      %s141 = sphi 0, %s139
      %s142 = sphi 0, %s141
      %s156 = sphi 0, %s142
      %s160 = sphi 0, %s160
      %s162 = sphi 0, %s160
      %s163 = sphi 0, %s162
      %s177 = sphi 0, %s163
      %s185 = sphi 0, %s187
      %s188 = sphi 0, %s185
      %s189 = sphi 0, %s188
      %s205 = sphi 0, %s189
    $region4: #{tpu_custom_call.1} parent=1 // loop_header_branch
      %18 = sbr.rel (%p16) target = $region8
    $region5: #{tpu_custom_call.1} parent=1 // loop_body
      %s20 = ssub.s32 %s15, 1
      %s21 = ssub.s32 %s15, 2
      %s28 = sadd.s32 1, %s23
      %p29 = scmp.ge.s32.totalorder %s28, 2
      %s30 = scalar_select %p29, 0, %s28
      %s31 = sadd.s32 1, %s22
      %s32 = scalar_select %p29, %s31, %s22
      %p33 = scmp.ge.s32.totalorder %s32, 2
      %s34 = scalar_select %p33, 0, %s32
      %s35 = ssub.s32 %s22, %s34
      %p36 = scmp.eq.s32.totalorder %s35, 0
      %s38 = sadd.s32 %s37, 1
      %s39 = scalar_select %p36, %s37, %s38
      %p42 = pneg %p36
      %p43 = scmp.eq.s32.totalorder %s15, 3
      %p44 = por %p42, %p43
      %p45 = scmp.ne.s32.totalorder %s37, %s40
      %p46 = scmp.eq.s32.totalorder %s15, 0
      %p47 = por %p45, %p46
      %p48 = scmp.ne.s32.totalorder %s37, %s40
      %p49 = scmp.eq.s32.totalorder %s20, 3
      %p50 = por %p48, %p49
      %p51 = scmp.ne.s32.totalorder %s40, %s41
      %p52 = scmp.eq.s32.totalorder %s20, 0
      %p53 = por %p51, %p52
      %p54 = scmp.ne.s32.totalorder %s40, %s41
      %p55 = scmp.eq.s32.totalorder %s21, 3
      %p56 = por %p54, %p55
      %p58 = scmp.ne.s32.totalorder %s41, %s57
      %p59 = scmp.eq.s32.totalorder %s21, 0
      %p60 = por %p58, %p59
      %s61 = ssub.s32 %s23, %s30
      %p62 = scmp.eq.s32.totalorder %s61, 0
      %s64 = sadd.s32 %s63, 1
      %s65 = scalar_select %p62, %s63, %s64
      %p68 = pneg %p62
      %p69 = scmp.eq.s32.totalorder %s15, 3
      %p70 = por %p68, %p69
      %p71 = scmp.ne.s32.totalorder %s63, %s66
      %p72 = scmp.eq.s32.totalorder %s15, 0
      %p73 = por %p71, %p72
      %p74 = scmp.ne.s32.totalorder %s63, %s66
      %p75 = scmp.eq.s32.totalorder %s20, 3
      %p76 = por %p74, %p75
      %p77 = scmp.ne.s32.totalorder %s66, %s67
      %p78 = scmp.eq.s32.totalorder %s20, 0
      %p79 = por %p77, %p78
      %p80 = scmp.ne.s32.totalorder %s66, %s67
      %p81 = scmp.eq.s32.totalorder %s21, 3
      %p82 = por %p80, %p81
      %p84 = scmp.ne.s32.totalorder %s67, %s83
      %p85 = scmp.eq.s32.totalorder %s21, 0
      %p86 = por %p84, %p85
      %s87 = ssub.s32 %s23, %s30
      %p88 = scmp.eq.s32.totalorder %s87, 0
      %s90 = sadd.s32 %s89, 1
      %s91 = scalar_select %p88, %s89, %s90
      %p94 = pneg %p88
      %p95 = scmp.eq.s32.totalorder %s15, 3
      %p96 = por %p94, %p95
      %p97 = scmp.ne.s32.totalorder %s89, %s92
      %p98 = scmp.eq.s32.totalorder %s15, 0
      %p99 = por %p97, %p98
      %p100 = scmp.ne.s32.totalorder %s89, %s92
      %p101 = scmp.eq.s32.totalorder %s20, 3
      %p102 = por %p100, %p101
      %p103 = scmp.ne.s32.totalorder %s92, %s93
      %p104 = scmp.eq.s32.totalorder %s20, 0
      %p105 = por %p103, %p104
      %p106 = scmp.ne.s32.totalorder %s92, %s93
      %p107 = scmp.eq.s32.totalorder %s21, 3
      %p108 = por %p106, %p107
      %p110 = scmp.ne.s32.totalorder %s93, %s109
      %p111 = scmp.eq.s32.totalorder %s21, 0
      %p112 = por %p110, %p111
      %s113 = ssub.s32 %s23, %s30
      %p114 = scmp.eq.s32.totalorder %s113, 0
      %s116 = sadd.s32 %s115, 1
      %s117 = scalar_select %p114, %s115, %s116
      %p120 = pneg %p114
      %p121 = scmp.eq.s32.totalorder %s15, 3
      %p122 = por %p120, %p121
      %p123 = scmp.ne.s32.totalorder %s115, %s118
      %p124 = scmp.eq.s32.totalorder %s15, 0
      %p125 = por %p123, %p124
      %p126 = scmp.ne.s32.totalorder %s115, %s118
      %p127 = scmp.eq.s32.totalorder %s20, 3
      %p128 = por %p126, %p127
      %p129 = scmp.ne.s32.totalorder %s118, %s119
      %p130 = scmp.eq.s32.totalorder %s20, 0
      %p131 = por %p129, %p130
      %p132 = scmp.ne.s32.totalorder %s118, %s119
      %p133 = scmp.eq.s32.totalorder %s21, 3
      %p134 = por %p132, %p133
      %p136 = scmp.ne.s32.totalorder %s119, %s135
      %p137 = scmp.eq.s32.totalorder %s21, 0
      %p138 = por %p136, %p137
      %s140 = sadd.s32 %s139, 1
      %p143 = scmp.eq.s32.totalorder %s15, 3
      %p144 = scmp.ne.s32.totalorder %s139, %s141
      %p145 = scmp.eq.s32.totalorder %s15, 0
      %p146 = por %p144, %p145
      %p147 = scmp.ne.s32.totalorder %s139, %s141
      %p148 = scmp.eq.s32.totalorder %s20, 3
      %p149 = por %p147, %p148
      %p150 = scmp.ne.s32.totalorder %s141, %s142
      %p151 = scmp.eq.s32.totalorder %s20, 0
      %p152 = por %p150, %p151
      %p153 = scmp.ne.s32.totalorder %s141, %s142
      %p154 = scmp.eq.s32.totalorder %s21, 3
      %p155 = por %p153, %p154
      %p157 = scmp.ne.s32.totalorder %s142, %s156
      %p158 = scmp.eq.s32.totalorder %s21, 0
      %p159 = por %p157, %p158
      %s161 = sadd.s32 %s160, 1
      %p164 = scmp.eq.s32.totalorder %s15, 3
      %p165 = scmp.ne.s32.totalorder %s160, %s162
      %p166 = scmp.eq.s32.totalorder %s15, 0
      %p167 = por %p165, %p166
      %p168 = scmp.ne.s32.totalorder %s160, %s162
      %p169 = scmp.eq.s32.totalorder %s20, 3
      %p170 = por %p168, %p169
      %p171 = scmp.ne.s32.totalorder %s162, %s163
      %p172 = scmp.eq.s32.totalorder %s20, 0
      %p173 = por %p171, %p172
      %p174 = scmp.ne.s32.totalorder %s162, %s163
      %p175 = scmp.eq.s32.totalorder %s21, 3
      %p176 = por %p174, %p175
      %p178 = scmp.ne.s32.totalorder %s163, %s177
      %p179 = scmp.eq.s32.totalorder %s21, 0
      %p180 = por %p178, %p179
      %s181 = ssub.s32 %s22, %s34
      %s182 = ssub.s32 %s23, %s30
      %s183 = sor.u32 %s181, %s182
      %p184 = scmp.eq.s32.totalorder %s183, 0
      %s186 = sadd.s32 %s185, 1
      %s187 = scalar_select %p184, %s185, %s186
      %p190 = pneg %p184
      %p191 = scmp.eq.s32.totalorder %s15, 3
      %p192 = por %p190, %p191
      %p193 = scmp.ne.s32.totalorder %s185, %s188
      %p194 = scmp.eq.s32.totalorder %s15, 0
      %p195 = por %p193, %p194
      %p196 = scmp.ne.s32.totalorder %s185, %s188
      %p197 = scmp.eq.s32.totalorder %s20, 3
      %p198 = por %p196, %p197
      %p199 = scmp.ne.s32.totalorder %s188, %s189
      %p200 = scmp.eq.s32.totalorder %s20, 0
      %p201 = por %p199, %p200
      %p202 = scmp.ne.s32.totalorder %s188, %s189
      %p203 = scmp.eq.s32.totalorder %s21, 3
      %p204 = por %p202, %p203
      %p206 = scmp.ne.s32.totalorder %s189, %s205
      %p207 = scmp.eq.s32.totalorder %s21, 0
      %p208 = por %p206, %p207
      %p209 = scmp.le.s32.totalorder 1, %s15
      %p210 = scmp.lt.s32.totalorder %s15, 5
      %p211 = pnand %p209, %p210
      %p212 = pneg %p211
      // Predicated region
      $region9: #{tpu_custom_call.1} parent=5 // pred_check
        _
      $region10: #{tpu_custom_call.1} parent=5 // pred_check_branch
        %214 = sbr.rel (%p211) target = $region12
      $region11: #{tpu_custom_call.1} parent=5 // pred_region
        %s215 = ssub.s32 %s15, 1
        // Predicated region
        $region13: #{tpu_custom_call.1} parent=11 // pred_check
          %p216 = pneg %p152
        $region14: #{tpu_custom_call.1} parent=11 // pred_check_branch
          %218 = sbr.rel (%p216) target = $region16
        $region15: #{tpu_custom_call.1} parent=11 // pred_region
          _
        $region16: #{tpu_custom_call.1} parent=11 // pred_fallthru
          _
        // Predicated region
        $region17: #{tpu_custom_call.1} parent=11 // pred_check
          %p219 = pneg %p173
        $region18: #{tpu_custom_call.1} parent=11 // pred_check_branch
          %221 = sbr.rel (%p219) target = $region20
        $region19: #{tpu_custom_call.1} parent=11 // pred_region
          _
        $region20: #{tpu_custom_call.1} parent=11 // pred_fallthru
          _
      $region12: #{tpu_custom_call.1} parent=5 // pred_fallthru
        _
      %p222 = scmp.lt.s32.totalorder %s15, 4
      // Predicated region
      $region21: #{tpu_custom_call.1} parent=5 // pred_check
        %p223 = pneg %p222
      $region22: #{tpu_custom_call.1} parent=5 // pred_check_branch
        %225 = sbr.rel (%p223) target = $region24
      $region23: #{tpu_custom_call.1} parent=5 // pred_region
        // Predicated region
        $region25: #{tpu_custom_call.1} parent=23 // pred_check
          %p226 = pneg %p47
        $region26: #{tpu_custom_call.1} parent=23 // pred_check_branch
          %228 = sbr.rel (%p226) target = $region28
        $region27: #{tpu_custom_call.1} parent=23 // pred_region
          %p229 = scmp.lt.s32.totalorder %s22, 1
          %s230 = scalar_select %p229, %s22, 1
          %s231 = smul.addr %s230, 3
          %s232 = smul.addr %s231, 4
          %s233 = scalar_lea.vmem %s0, %s232
        $region28: #{tpu_custom_call.1} parent=23 // pred_fallthru
          _
        // Predicated region
        $region29: #{tpu_custom_call.1} parent=23 // pred_check
          %p234 = pneg %p73
        $region30: #{tpu_custom_call.1} parent=23 // pred_check_branch
          %236 = sbr.rel (%p234) target = $region32
        $region31: #{tpu_custom_call.1} parent=23 // pred_region
          %s237 = sand.u32 %s63, 1
          %s238 = sand.u32 %s63, 1
          %s239 = smul.addr %s238, 24
          %s240 = scalar_lea.vmem [#allocation2], %s239
          %s241 = smul.u32 2, %s23
          %s242 = smul.addr %s241, 4
          %s243 = scalar_lea.vmem %s1, %s242
          // Predicated region
          $region33: #{tpu_custom_call.1} parent=31 // pred_check
            _
          $region34: #{tpu_custom_call.1} parent=31 // pred_check_branch
            %245 = sbr.rel (0) target = $region36
          $region35: #{tpu_custom_call.1} parent=31 // pred_region
            // Predicated region
            $region37: #{tpu_custom_call.1} parent=35 // pred_check
              _
            $region38: #{tpu_custom_call.1} parent=35 // pred_check_branch
              %247 = sbr.rel target = $region40
            $region39: #{tpu_custom_call.1} parent=35 // pred_region
              // Predicated region
              $region52: #{tpu_custom_call.1} parent=39 // pred_check
                _
              $region53: #{tpu_custom_call.1} parent=39 // pred_check_branch
                %272 = sbr.rel (0) target = $region55
              $region54: #{tpu_custom_call.1} parent=39 // pred_region
                loop: start=0, step=1, limit=1
                $region56: #{tpu_custom_call.1} parent=54 // loop_pre_header
                  _
                $region57: #{tpu_custom_call.1} parent=54 // loop_header
                  %s274 = sphi 0, %s278
                  %p275 = scmp.ge.s32.totalorder %s274, 1
                  %s279 = sphi %s243, %s243
                  %s280 = sphi %s240, %s240
                $region58: #{tpu_custom_call.1} parent=54 // loop_header_branch
                  %277 = sbr.rel (%p275) target = $region62
                $region59: #{tpu_custom_call.1} parent=54 // loop_body
                  _
                $region60: #{tpu_custom_call.1} parent=54 // loop_footer
                  %s278 = sadd.s32 1, %s274
                $region61: #{tpu_custom_call.1} parent=54 // loop_footer_branch
                  %273 = sbr.rel target = $region57
                $region62: #{tpu_custom_call.1} parent=54 // loop_exit
                  _
                loop: start=0, step=1, limit=1
                $region63: #{tpu_custom_call.1} parent=54 // loop_pre_header
                  _
                $region64: #{tpu_custom_call.1} parent=54 // loop_header
                  %s283 = sphi 0, %s287
                  %p284 = scmp.ge.s32.totalorder %s283, 1
                  %s288 = sphi %s243, %s243
                  %s289 = sphi %s240, %s240
                $region65: #{tpu_custom_call.1} parent=54 // loop_header_branch
                  %286 = sbr.rel (%p284) target = $region69
                $region66: #{tpu_custom_call.1} parent=54 // loop_body
                  %v290 = vld [vmem:[%s288] sm:$0xf]
                  %291 = vst [vmem:[%s289] sm:$0xf] %v290
                  %v292 = vld [vmem:[%s288 + $0x4] sm:$0xf]
                  %293 = vst [vmem:[%s289 + $0x4] sm:$0xf] %v292
                  %v294 = vld [vmem:[%s288 + $0x10] sm:$0xf]
                  %295 = vst [vmem:[%s289 + $0x8] sm:$0xf] %v294
                  %v296 = vld [vmem:[%s288 + $0x14] sm:$0xf]
                  %297 = vst [vmem:[%s289 + $0xc] sm:$0xf] %v296
                  %v298 = vld [vmem:[%s288 + $0x20] sm:$0xf]
                  %299 = vst [vmem:[%s289 + $0x10] sm:$0xf] %v298
                  %v300 = vld [vmem:[%s288 + $0x24] sm:$0xf]
                  %301 = vst [vmem:[%s289 + $0x14] sm:$0xf] %v300
                $region67: #{tpu_custom_call.1} parent=54 // loop_footer
                  %s287 = sadd.s32 1, %s283
                $region68: #{tpu_custom_call.1} parent=54 // loop_footer_branch
                  %282 = sbr.rel target = $region64
                $region69: #{tpu_custom_call.1} parent=54 // loop_exit
                  _
              $region55: #{tpu_custom_call.1} parent=39 // pred_fallthru
                _
            $region40: #{tpu_custom_call.1} parent=35 // pred_fallthru
              _
            // Predicated region
            $region41: #{tpu_custom_call.1} parent=35 // pred_check
              _
            $region42: #{tpu_custom_call.1} parent=35 // pred_check_branch
              %249 = sbr.rel (0) target = $region44
            $region43: #{tpu_custom_call.1} parent=35 // pred_region
              loop: start=0, step=1, limit=1
              $region45: #{tpu_custom_call.1} parent=43 // loop_pre_header
                _
              $region46: #{tpu_custom_call.1} parent=43 // loop_header
                %s252 = sphi 0, %s256
                %p253 = scmp.ge.s32.totalorder %s252, 1
                %s257 = sphi %s243, %s243
                %s258 = sphi %s240, %s240
              $region47: #{tpu_custom_call.1} parent=43 // loop_header_branch
                %255 = sbr.rel (%p253) target = $region51
              $region48: #{tpu_custom_call.1} parent=43 // loop_body
                %v259 = vld [vmem:[%s257] sm:$0xf]
                %260 = vst [vmem:[%s258] sm:$0xf] %v259
                %v261 = vld [vmem:[%s257 + $0x4] sm:$0xf]
                %262 = vst [vmem:[%s258 + $0x4] sm:$0xf] %v261
                %v263 = vld [vmem:[%s257 + $0x10] sm:$0xf]
                %264 = vst [vmem:[%s258 + $0x8] sm:$0xf] %v263
                %v265 = vld [vmem:[%s257 + $0x14] sm:$0xf]
                %266 = vst [vmem:[%s258 + $0xc] sm:$0xf] %v265
                %v267 = vld [vmem:[%s257 + $0x20] sm:$0xf]
                %268 = vst [vmem:[%s258 + $0x10] sm:$0xf] %v267
                %v269 = vld [vmem:[%s257 + $0x24] sm:$0xf]
                %270 = vst [vmem:[%s258 + $0x14] sm:$0xf] %v269
              $region49: #{tpu_custom_call.1} parent=43 // loop_footer
                %s256 = sadd.s32 1, %s252
              $region50: #{tpu_custom_call.1} parent=43 // loop_footer_branch
                %251 = sbr.rel target = $region46
              $region51: #{tpu_custom_call.1} parent=43 // loop_exit
                _
            $region44: #{tpu_custom_call.1} parent=35 // pred_fallthru
              _
          $region36: #{tpu_custom_call.1} parent=31 // pred_fallthru
            _
          %302 = vnop
        $region32: #{tpu_custom_call.1} parent=23 // pred_fallthru
          _
        // Predicated region
        $region70: #{tpu_custom_call.1} parent=23 // pred_check
          %p303 = pneg %p99
        $region71: #{tpu_custom_call.1} parent=23 // pred_check_branch
          %305 = sbr.rel (%p303) target = $region73
        $region72: #{tpu_custom_call.1} parent=23 // pred_region
          %s306 = smul.u32 2, %s23
          %p307 = scmp.lt.s32.totalorder %s306, 3
          %s308 = scalar_select %p307, %s306, 3
          %s309 = smul.addr %s308, 8
          %s310 = scalar_lea.vmem %s2, %s309
          %s311 = smul.u32 2, %s23
        $region73: #{tpu_custom_call.1} parent=23 // pred_fallthru
          _
        // Predicated region
        $region74: #{tpu_custom_call.1} parent=23 // pred_check
          %p312 = pneg %p125
        $region75: #{tpu_custom_call.1} parent=23 // pred_check_branch
          %314 = sbr.rel (%p312) target = $region77
        $region76: #{tpu_custom_call.1} parent=23 // pred_region
          %s315 = smul.u32 2, %s23
          %p316 = scmp.lt.s32.totalorder %s315, 3
          %s317 = scalar_select %p316, %s315, 3
          %s318 = smul.addr %s317, 8
          %s319 = scalar_lea.vmem %s3, %s318
          %s320 = smul.u32 2, %s23
        $region77: #{tpu_custom_call.1} parent=23 // pred_fallthru
          _
      $region24: #{tpu_custom_call.1} parent=5 // pred_fallthru
        _
      %p321 = scmp.le.s32.totalorder 1, %s15
      %p322 = scmp.lt.s32.totalorder %s15, 5
      %p323 = pnand %p321, %p322
      %p324 = pneg %p323
      // Predicated region
      $region78: #{tpu_custom_call.1} parent=5 // pred_check
        _
      $region79: #{tpu_custom_call.1} parent=5 // pred_check_branch
        %326 = sbr.rel (%p323) target = $region81
      $region80: #{tpu_custom_call.1} parent=5 // pred_region
        %s327 = ssub.s32 %s15, 1
        %s328 = sand.u32 %s66, 1
        %s329 = sand.u32 %s66, 1
        %s330 = smul.addr %s329, 24
        %s331 = scalar_lea.vmem [#allocation2], %s330
        // Predicated region
        $region82: #{tpu_custom_call.1} parent=80 // pred_check
          %p332 = pneg %p79
        $region83: #{tpu_custom_call.1} parent=80 // pred_check_branch
          %334 = sbr.rel (%p332) target = $region85
        $region84: #{tpu_custom_call.1} parent=80 // pred_region
          _
        $region85: #{tpu_custom_call.1} parent=80 // pred_fallthru
          _
        %p335 = scmp.lt.s32.totalorder %s24, 1
        %s336 = scalar_select %p335, %s24, 1
        %s337 = smul.addr %s336, 3
        %s338 = smul.addr %s337, 4
        %s339 = scalar_lea.vmem %s0, %s338
        %p340 = pneg %p53
        %p341 = pneg %p50
        %s342 = sand.u32 %s66, 1
        %s343 = sand.u32 %s66, 1
        %s344 = smul.addr %s343, 24
        %s345 = scalar_lea.vmem [#allocation2], %s344
        %p346 = pneg %p79
        %p347 = pneg %p76
        %s348 = smul.u32 2, %s25
        %p349 = scmp.lt.s32.totalorder %s348, 3
        %s350 = scalar_select %p349, %s348, 3
        %s351 = smul.addr %s350, 8
        %s352 = scalar_lea.vmem %s2, %s351
        %p353 = pneg %p105
        %p354 = pneg %p102
        %s355 = smul.u32 2, %s25
        %p356 = scmp.lt.s32.totalorder %s355, 3
        %s357 = scalar_select %p356, %s355, 3
        %s358 = smul.addr %s357, 8
        %s359 = scalar_lea.vmem %s3, %s358
        %p360 = pneg %p131
        %p361 = pneg %p128
        %p362 = pneg %p152
        %p363 = pneg %p149
        %p364 = pneg %p173
        %p365 = pneg %p170
        %p366 = pneg %p201
        %p367 = pneg %p198
        %s368 = sand.u32 %s188, 1
        %s369 = scalar_lea.sflag [#allocation4], %s368
        %s370 = sand.u32 %s188, 1
        %s371 = smul.addr %s370, 48
        %s372 = scalar_lea.vmem [#allocation3], %s371
        %p373 = scmp.lt.s32.totalorder %s24, 1
        %s374 = scalar_select %p373, %s24, 1
        %s375 = smul.addr %s374, 3
        %s376 = smul.addr %s375, 4
        %s377 = scalar_lea.vmem %s0, %s376
        %s378 = smul.u32 2, %s25
        %s379 = smul.u32 2, %s25
        %p380 = scmp.lt.s32.totalorder %s379, 3
        %s381 = scalar_select %p380, %s379, 3
        %s382 = smul.addr %s381, 8
        %s383 = scalar_lea.vmem %s2, %s382
        %s384 = smul.u32 2, %s25
        %s385 = smul.u32 2, %s25
        %p386 = scmp.lt.s32.totalorder %s385, 3
        %s387 = scalar_select %p386, %s385, 3
        %s388 = smul.addr %s387, 8
        %s389 = scalar_lea.vmem %s3, %s388
        %s390 = smul.u32 2, %s25
        %s391 = smul.u32 2, %s25
        %v393 = vld [vmem:[%s377] sm:$0xff]
        %v394 = vld [vmem:[%s377 + $0x8] sm:$0xf]
        %v397 = vunpack.c.l.b16 %v393
        %v398 = vunpack.c.h.b16 %v393
        %v399 = vunpack.c.l.b16 %v394
        %v400 = vpack.c.b16 %v397, %v397
        %v401 = vpack.c.b16 %v398, %v398
        %v402 = vpack.c.b16 %v399, %v399
        %403 = vrot.lane.b32.xlu0 %v400, 127
        %v404 = vpop.permute.xlu0 %403
        %405 = vrot.lane.b32.xlu0 %v401, 127
        %v406 = vpop.permute.xlu0 %405
        %407 = vrot.lane.b32.xlu0 %v402, 127
        %v408 = vpop.permute.xlu0 %407
        %vm409 = vcmask 1039360
        %v410 = vsel %vm409, %v404, %v406
        %v411 = vsel %vm409, %v406, %v408
        %412 = vrot.lane.b32.xlu0 %v400, 126
        %v413 = vpop.permute.xlu0 %412
        %414 = vrot.lane.b32.xlu0 %v401, 126
        %v415 = vpop.permute.xlu0 %414
        %416 = vrot.lane.b32.xlu0 %v402, 126
        %v417 = vpop.permute.xlu0 %416
        %vm418 = vcmask 1031168
        %v419 = vsel %vm418, %v413, %v415
        %v420 = vsel %vm418, %v415, %v417
        %vm421 = vcmask 1043456
        %v424 = vsel %vm421, %v400, %v410
        %v428 = vsel %vm421, %v401, %v411
        %v432 = vsel %vm421, %v402, %v408
        %v434 = vld [vmem:[%s331] sm:$0xf]
        %v435 = vld [vmem:[%s331 + $0x4] sm:$0xf]
        %s436 = scalar_lea.vmem %s331, 8 [#allocation2]
        %v437 = vld [vmem:[%s436] sm:$0xf]
        %v438 = vld [vmem:[%s436 + $0x4] sm:$0xf]
        %v441 = vunpack.c.l.b16 %v437
        %v442 = vunpack.c.l.b16 %v438
        %v443 = vpack.c.b16 %v442, %v441
        %447 = vrot.lane.b32.xlu0 %v424, 110
        %v448 = vpop.permute.xlu0 %447
        %449 = vrot.lane.b32.xlu0 %v428, 110
        %v450 = vpop.permute.xlu0 %449
        %451 = vrot.lane.b32.xlu0 %v432, 110
        %v452 = vpop.permute.xlu0 %451
        %453 = vrot.lane.b32.xlu0 %v419, 110
        %v454 = vpop.permute.xlu0 %453
        %455 = vrot.lane.b32.xlu0 %v420, 110
        %v456 = vpop.permute.xlu0 %455
        %457 = vrot.lane.b32.xlu0 %v417, 110
        %v458 = vpop.permute.xlu0 %457
        %vm459 = vcmask 900096
        %v460 = vsel %vm459, %v448, %v450
        %v461 = vsel %vm459, %v450, %v452
        %v462 = vsel %vm459, %v454, %v456
        %v463 = vsel %vm459, %v456, %v458
        %vm467 = vcmask 195584
        %v469 = vsel %vm467, %v443, 0
        %v472 = vsel %vm421, %v462, 0
        %v475 = vsel %vm421, %v463, 0
        %v478 = vsel %vm421, %v458, 0
        %480 = vmatprep.subr.bf16.mxu0 %v461
        %481 = vmatpush1.bf16.msra.mxu0 %v460
        %482 = vmatprep.subr.bf16.mxu0 %v475
        %483 = vmatpush1.bf16.msra.mxu0 %v472
        %484 = vmatprep.subr.bf16.mxu0 0
        %485 = vmatpush1.bf16.msra.mxu0 0
        %486 = vmatprep.subr.bf16.mxu0 0
        %487 = vmatpush1.bf16.msra.mxu0 0
        %488 = vmatprep.subr.bf16.mxu0 0
        %489 = vmatpush1.bf16.msra.mxu0 0
        %490 = vmatprep.subr.bf16.mxu0 0
        %491 = vmatpush1.bf16.msra.mxu0 0
        %492 = vmatprep.subr.bf16.mxu0 0
        %493 = vmatpush1.bf16.msra.mxu0 0
        %494 = vmatprep.subr.bf16.mxu0 0
        %495 = vmatpush1.bf16.msra.mxu0 0
        %496 = vmatprep.subr.bf16.mxu0 0
        %497 = vmatpush1.bf16.msra.mxu0 0
        %498 = vmatprep.subr.bf16.mxu0 0
        %499 = vmatpush1.bf16.msra.mxu0 0
        %500 = vmatprep.subr.bf16.mxu0 0
        %501 = vmatpush1.bf16.msra.mxu0 0
        %502 = vmatprep.subr.bf16.mxu0 0
        %503 = vmatpush1.bf16.msra.mxu0 0
        %504 = vmatprep.subr.bf16.mxu0 0
        %505 = vmatpush1.bf16.msra.mxu0 0
        %506 = vmatprep.subr.bf16.mxu0 0
        %507 = vmatpush1.bf16.msra.mxu0 0
        %508 = vmatprep.subr.bf16.mxu0 0
        %509 = vmatpush1.bf16.msra.mxu0 0
        %510 = vmatprep.subr.bf16.mxu0 0
        %511 = vmatpush1.bf16.msra.mxu0 0
        %512 = vmatprep.mubr.bf16.mxu0 0
        %513 = vmatmul.mubr.bf16.gmra.mrb[0].mxu0 %v469
        %v514 = vpop.f32.mrb[0].mxu0
        %v515 = vadd.f32 0.0, %v514
        %v516 = vpop.f32.mrb[0].mxu0
        %v517 = vadd.f32 0.0, %v516
        %v518 = vpop.f32.mrb[0].mxu0
        %v519 = vadd.f32 0.0, %v518
        %v520 = vpop.f32.mrb[0].mxu0
        %v521 = vadd.f32 0.0, %v520
        %522 = vdwg.mxu0
        %523 = vmatprep.subr.bf16.mxu0 0
        %524 = vmatpush1.bf16.msra.mxu0 %v452
        %525 = vmatprep.subr.bf16.mxu0 0
        %526 = vmatpush1.bf16.msra.mxu0 %v478
        %527 = vmatprep.subr.bf16.mxu0 0
        %528 = vmatpush1.bf16.msra.mxu0 0
        %529 = vmatprep.subr.bf16.mxu0 0
        %530 = vmatpush1.bf16.msra.mxu0 0
        %531 = vmatprep.subr.bf16.mxu0 0
        %532 = vmatpush1.bf16.msra.mxu0 0
        %533 = vmatprep.subr.bf16.mxu0 0
        %534 = vmatpush1.bf16.msra.mxu0 0
        %535 = vmatprep.subr.bf16.mxu0 0
        %536 = vmatpush1.bf16.msra.mxu0 0
        %537 = vmatprep.subr.bf16.mxu0 0
        %538 = vmatpush1.bf16.msra.mxu0 0
        %539 = vmatprep.subr.bf16.mxu0 0
        %540 = vmatpush1.bf16.msra.mxu0 0
        %541 = vmatprep.subr.bf16.mxu0 0
        %542 = vmatpush1.bf16.msra.mxu0 0
        %543 = vmatprep.subr.bf16.mxu0 0
        %544 = vmatpush1.bf16.msra.mxu0 0
        %545 = vmatprep.subr.bf16.mxu0 0
        %546 = vmatpush1.bf16.msra.mxu0 0
        %547 = vmatprep.subr.bf16.mxu0 0
        %548 = vmatpush1.bf16.msra.mxu0 0
        %549 = vmatprep.subr.bf16.mxu0 0
        %550 = vmatpush1.bf16.msra.mxu0 0
        %551 = vmatprep.subr.bf16.mxu0 0
        %552 = vmatpush1.bf16.msra.mxu0 0
        %553 = vmatprep.subr.bf16.mxu0 0
        %554 = vmatpush1.bf16.msra.mxu0 0
        %555 = vmatprep.mubr.bf16.mxu0 0
        %556 = vmatmul.mubr.bf16.gmra.mrb[0].mxu0 %v469
        %v557 = vpop.f32.mrb[0].mxu0
        %v558 = vadd.f32 0.0, %v557
        %v559 = vpop.f32.mrb[0].mxu0
        %v560 = vpop.f32.mrb[0].mxu0
        %v561 = vadd.f32 0.0, %v560
        %v562 = vpop.f32.mrb[0].mxu0
        %563 = vdwg.mxu0
        %v566 = vunpack.c.l.b16 %v434
        %v567 = vunpack.c.l.b16 %v435
        %v568 = vpack.c.b16 %v567, %v566
        %v570 = vsel %vm467, %v568, 0
        %v573 = vsel %vm421, %v419, 0
        %v576 = vsel %vm421, %v420, 0
        %v579 = vsel %vm421, %v417, 0
        %581 = vmatprep.subr.bf16.mxu0 %v428
        %582 = vmatpush1.bf16.msra.mxu0 %v424
        %583 = vmatprep.subr.bf16.mxu0 %v576
        %584 = vmatpush1.bf16.msra.mxu0 %v573
        %585 = vmatprep.subr.bf16.mxu0 0
        %586 = vmatpush1.bf16.msra.mxu0 0
        %587 = vmatprep.subr.bf16.mxu0 0
        %588 = vmatpush1.bf16.msra.mxu0 0
        %589 = vmatprep.subr.bf16.mxu0 0
        %590 = vmatpush1.bf16.msra.mxu0 0
        %591 = vmatprep.subr.bf16.mxu0 0
        %592 = vmatpush1.bf16.msra.mxu0 0
        %593 = vmatprep.subr.bf16.mxu0 0
        %594 = vmatpush1.bf16.msra.mxu0 0
        %595 = vmatprep.subr.bf16.mxu0 0
        %596 = vmatpush1.bf16.msra.mxu0 0
        %597 = vmatprep.subr.bf16.mxu0 0
        %598 = vmatpush1.bf16.msra.mxu0 0
        %599 = vmatprep.subr.bf16.mxu0 0
        %600 = vmatpush1.bf16.msra.mxu0 0
        %601 = vmatprep.subr.bf16.mxu0 0
        %602 = vmatpush1.bf16.msra.mxu0 0
        %603 = vmatprep.subr.bf16.mxu0 0
        %604 = vmatpush1.bf16.msra.mxu0 0
        %605 = vmatprep.subr.bf16.mxu0 0
        %606 = vmatpush1.bf16.msra.mxu0 0
        %607 = vmatprep.subr.bf16.mxu0 0
        %608 = vmatpush1.bf16.msra.mxu0 0
        %609 = vmatprep.subr.bf16.mxu0 0
        %610 = vmatpush1.bf16.msra.mxu0 0
        %611 = vmatprep.subr.bf16.mxu0 0
        %612 = vmatpush1.bf16.msra.mxu0 0
        %613 = vmatprep.mubr.bf16.mxu0 0
        %614 = vmatmul.mubr.bf16.gmra.mrb[0].mxu0 %v570
        %v615 = vpop.f32.mrb[0].mxu0
        %v616 = vadd.f32 %v515, %v615
        %v617 = vpop.f32.mrb[0].mxu0
        %v618 = vadd.f32 %v517, %v617
        %v619 = vpop.f32.mrb[0].mxu0
        %v620 = vadd.f32 %v519, %v619
        %v621 = vpop.f32.mrb[0].mxu0
        %v622 = vadd.f32 %v521, %v621
        %623 = vdwg.mxu0
        %624 = vmatprep.subr.bf16.mxu0 0
        %625 = vmatpush1.bf16.msra.mxu0 %v432
        %626 = vmatprep.subr.bf16.mxu0 0
        %627 = vmatpush1.bf16.msra.mxu0 %v579
        %628 = vmatprep.subr.bf16.mxu0 0
        %629 = vmatpush1.bf16.msra.mxu0 0
        %630 = vmatprep.subr.bf16.mxu0 0
        %631 = vmatpush1.bf16.msra.mxu0 0
        %632 = vmatprep.subr.bf16.mxu0 0
        %633 = vmatpush1.bf16.msra.mxu0 0
        %634 = vmatprep.subr.bf16.mxu0 0
        %635 = vmatpush1.bf16.msra.mxu0 0
        %636 = vmatprep.subr.bf16.mxu0 0
        %637 = vmatpush1.bf16.msra.mxu0 0
        %638 = vmatprep.subr.bf16.mxu0 0
        %639 = vmatpush1.bf16.msra.mxu0 0
        %640 = vmatprep.subr.bf16.mxu0 0
        %641 = vmatpush1.bf16.msra.mxu0 0
        %642 = vmatprep.subr.bf16.mxu0 0
        %643 = vmatpush1.bf16.msra.mxu0 0
        %644 = vmatprep.subr.bf16.mxu0 0
        %645 = vmatpush1.bf16.msra.mxu0 0
        %646 = vmatprep.subr.bf16.mxu0 0
        %647 = vmatpush1.bf16.msra.mxu0 0
        %648 = vmatprep.subr.bf16.mxu0 0
        %649 = vmatpush1.bf16.msra.mxu0 0
        %650 = vmatprep.subr.bf16.mxu0 0
        %651 = vmatpush1.bf16.msra.mxu0 0
        %652 = vmatprep.subr.bf16.mxu0 0
        %653 = vmatpush1.bf16.msra.mxu0 0
        %654 = vmatprep.subr.bf16.mxu0 0
        %655 = vmatpush1.bf16.msra.mxu0 0
        %656 = vmatprep.mubr.bf16.mxu0 0
        %657 = vmatmul.mubr.bf16.gmra.mrb[0].mxu0 %v570
        %v658 = vpop.f32.mrb[0].mxu0
        %v659 = vadd.f32 %v558, %v658
        %v660 = vpop.f32.mrb[0].mxu0
        %v661 = vpop.f32.mrb[0].mxu0
        %v662 = vadd.f32 %v561, %v661
        %v663 = vpop.f32.mrb[0].mxu0
        %664 = vdwg.mxu0
        %s665 = scalar_lea.vmem %s331, 16 [#allocation2]
        %v666 = vld [vmem:[%s665] sm:$0xf]
        %v667 = vld [vmem:[%s665 + $0x4] sm:$0xf]
        %v670 = vunpack.c.l.b16 %v666
        %v671 = vunpack.c.l.b16 %v667
        %v672 = vpack.c.b16 %v671, %v670
        %673 = vrot.lane.b32.xlu0 %v424, 92
        %v674 = vpop.permute.xlu0 %673
        %675 = vrot.lane.b32.xlu0 %v428, 92
        %v676 = vpop.permute.xlu0 %675
        %677 = vrot.lane.b32.xlu0 %v432, 92
        %v678 = vpop.permute.xlu0 %677
        %679 = vrot.lane.b32.xlu0 %v419, 92
        %v680 = vpop.permute.xlu0 %679
        %681 = vrot.lane.b32.xlu0 %v420, 92
        %v682 = vpop.permute.xlu0 %681
        %683 = vrot.lane.b32.xlu0 %v417, 92
        %v684 = vpop.permute.xlu0 %683
        %vm685 = vcmask 752640
        %v686 = vsel %vm685, %v674, %v676
        %v687 = vsel %vm685, %v676, %v678
        %v688 = vsel %vm685, %v680, %v682
        %v689 = vsel %vm685, %v682, %v684
        %v694 = vsel %vm467, %v672, 0
        %v697 = vsel %vm421, %v688, 0
        %v700 = vsel %vm421, %v689, 0
        %v703 = vsel %vm421, %v684, 0
        %705 = vmatprep.subr.bf16.mxu0 %v687
        %706 = vmatpush1.bf16.msra.mxu0 %v686
        %707 = vmatprep.subr.bf16.mxu0 %v700
        %708 = vmatpush1.bf16.msra.mxu0 %v697
        %709 = vmatprep.subr.bf16.mxu0 0
        %710 = vmatpush1.bf16.msra.mxu0 0
        %711 = vmatprep.subr.bf16.mxu0 0
        %712 = vmatpush1.bf16.msra.mxu0 0
        %713 = vmatprep.subr.bf16.mxu0 0
        %714 = vmatpush1.bf16.msra.mxu0 0
        %715 = vmatprep.subr.bf16.mxu0 0
        %716 = vmatpush1.bf16.msra.mxu0 0
        %717 = vmatprep.subr.bf16.mxu0 0
        %718 = vmatpush1.bf16.msra.mxu0 0
        %719 = vmatprep.subr.bf16.mxu0 0
        %720 = vmatpush1.bf16.msra.mxu0 0
        %721 = vmatprep.subr.bf16.mxu0 0
        %722 = vmatpush1.bf16.msra.mxu0 0
        %723 = vmatprep.subr.bf16.mxu0 0
        %724 = vmatpush1.bf16.msra.mxu0 0
        %725 = vmatprep.subr.bf16.mxu0 0
        %726 = vmatpush1.bf16.msra.mxu0 0
        %727 = vmatprep.subr.bf16.mxu0 0
        %728 = vmatpush1.bf16.msra.mxu0 0
        %729 = vmatprep.subr.bf16.mxu0 0
        %730 = vmatpush1.bf16.msra.mxu0 0
        %731 = vmatprep.subr.bf16.mxu0 0
        %732 = vmatpush1.bf16.msra.mxu0 0
        %733 = vmatprep.subr.bf16.mxu0 0
        %734 = vmatpush1.bf16.msra.mxu0 0
        %735 = vmatprep.subr.bf16.mxu0 0
        %736 = vmatpush1.bf16.msra.mxu0 0
        %737 = vmatprep.mubr.bf16.mxu0 0
        %738 = vmatmul.mubr.bf16.gmra.mrb[0].mxu0 %v694
        %v739 = vpop.f32.mrb[0].mxu0
        %v740 = vadd.f32 0.0, %v739
        %v741 = vpop.f32.mrb[0].mxu0
        %v742 = vadd.f32 0.0, %v741
        %v743 = vpop.f32.mrb[0].mxu0
        %v744 = vadd.f32 0.0, %v743
        %v745 = vpop.f32.mrb[0].mxu0
        %v746 = vadd.f32 0.0, %v745
        %747 = vdwg.mxu0
        %748 = vmatprep.subr.bf16.mxu0 0
        %749 = vmatpush1.bf16.msra.mxu0 %v678
        %750 = vmatprep.subr.bf16.mxu0 0
        %751 = vmatpush1.bf16.msra.mxu0 %v703
        %752 = vmatprep.subr.bf16.mxu0 0
        %753 = vmatpush1.bf16.msra.mxu0 0
        %754 = vmatprep.subr.bf16.mxu0 0
        %755 = vmatpush1.bf16.msra.mxu0 0
        %756 = vmatprep.subr.bf16.mxu0 0
        %757 = vmatpush1.bf16.msra.mxu0 0
        %758 = vmatprep.subr.bf16.mxu0 0
        %759 = vmatpush1.bf16.msra.mxu0 0
        %760 = vmatprep.subr.bf16.mxu0 0
        %761 = vmatpush1.bf16.msra.mxu0 0
        %762 = vmatprep.subr.bf16.mxu0 0
        %763 = vmatpush1.bf16.msra.mxu0 0
        %764 = vmatprep.subr.bf16.mxu0 0
        %765 = vmatpush1.bf16.msra.mxu0 0
        %766 = vmatprep.subr.bf16.mxu0 0
        %767 = vmatpush1.bf16.msra.mxu0 0
        %768 = vmatprep.subr.bf16.mxu0 0
        %769 = vmatpush1.bf16.msra.mxu0 0
        %770 = vmatprep.subr.bf16.mxu0 0
        %771 = vmatpush1.bf16.msra.mxu0 0
        %772 = vmatprep.subr.bf16.mxu0 0
        %773 = vmatpush1.bf16.msra.mxu0 0
        %774 = vmatprep.subr.bf16.mxu0 0
        %775 = vmatpush1.bf16.msra.mxu0 0
        %776 = vmatprep.subr.bf16.mxu0 0
        %777 = vmatpush1.bf16.msra.mxu0 0
        %778 = vmatprep.subr.bf16.mxu0 0
        %779 = vmatpush1.bf16.msra.mxu0 0
        %780 = vmatprep.mubr.bf16.mxu0 0
        %781 = vmatmul.mubr.bf16.gmra.mrb[0].mxu0 %v694
        %v782 = vpop.f32.mrb[0].mxu0
        %v783 = vadd.f32 0.0, %v782
        %v784 = vpop.f32.mrb[0].mxu0
        %v785 = vpop.f32.mrb[0].mxu0
        %v786 = vadd.f32 0.0, %v785
        %v787 = vpop.f32.mrb[0].mxu0
        %788 = vdwg.mxu0
        %v789 = vadd.f32 %v616, %v740
        %v790 = vadd.f32 %v618, %v742
        %v791 = vadd.f32 %v659, %v783
        %v792 = vadd.f32 %v620, %v744
        %v793 = vadd.f32 %v622, %v746
        %v794 = vadd.f32 %v662, %v786
        %v795 = vld [vmem:[%s4] sm:$0x7]
        %v797 = vlaneseq
        %v798 = vshrl.u32 %v797, 7
        %v799 = vsub.s32 0, %v798
        %v800 = vrot.slane %v795, %v799
        %v801 = vlaneseq
        %v802 = vshrl.u32 %v801, 7
        %v803 = vsub.s32 1, %v802
        %v804 = vrot.slane %v795, %v803
        %v805 = vlaneseq
        %v806 = vshrl.u32 %v805, 7
        %v807 = vsub.s32 2, %v806
        %v808 = vrot.slane %v795, %v807
        %v812 = vmul.f32 %v789, %v800
        %v813 = vmul.f32 %v790, %v804
        %v814 = vmul.f32 %v791, %v808
        %v815 = vmul.f32 %v792, %v800
        %v816 = vmul.f32 %v793, %v804
        %v817 = vmul.f32 %v794, %v808
        %v818 = vadd.f32 %v812, %v813
        %vm819 = vcmask 261120
        %v820 = vsel %vm819, %v814, 0.0
        %v821 = vadd.f32 %v818, %v820
        %822 = vadd.xlane.f32.xlu0 %v821
        %v823 = vpop.xlane.xlu0 %822
        %v824 = vadd.f32 %v815, %v816
        %v825 = vsel %vm819, %v817, 0.0
        %v826 = vadd.f32 %v824, %v825
        %827 = vadd.xlane.f32.xlu0 %v826
        %v828 = vpop.xlane.xlu0 %827
        %v829 = vmul.f32 %v812, %v812
        %v830 = vmul.f32 %v813, %v813
        %v831 = vmul.f32 %v814, %v814
        %v832 = vmul.f32 %v815, %v815
        %v833 = vmul.f32 %v816, %v816
        %v834 = vmul.f32 %v817, %v817
        %v835 = vadd.f32 %v829, %v830
        %v836 = vsel %vm819, %v831, 0.0
        %v837 = vadd.f32 %v835, %v836
        %838 = vadd.xlane.f32.xlu0 %v837
        %v839 = vpop.xlane.xlu0 %838
        %v840 = vadd.f32 %v832, %v833
        %v841 = vsel %vm819, %v834, 0.0
        %v842 = vadd.f32 %v840, %v841
        %843 = vadd.xlane.f32.xlu0 %v842
        %v844 = vpop.xlane.xlu0 %843
        %v845 = vld [vmem:[%s5] sm:$0xff]
        %v846 = vld [vmem:[%s5 + $0x8] sm:$0xff]
        %vm847 = vcmask 130048
        %v849 = vsel %vm847, %v845, 0
        %v852 = vsel %vm847, %v846, 0
        %854 = vmatprep.subr.mxu0 0.0
        %855 = vmatpush1.msra.mxu0 %v823
        %856 = vmatprep.subr.mxu0 0.0
        %857 = vmatpush1.msra.mxu0 %v828
        %858 = vmatprep.subr.mxu0 0.0
        %859 = vmatpush1.msra.mxu0 0.0
        %860 = vmatprep.subr.mxu0 0.0
        %861 = vmatpush1.msra.mxu0 0.0
        %862 = vmatprep.subr.mxu0 0.0
        %863 = vmatpush1.msra.mxu0 0.0
        %864 = vmatprep.subr.mxu0 0.0
        %865 = vmatpush1.msra.mxu0 0.0
        %866 = vmatprep.subr.mxu0 0.0
        %867 = vmatpush1.msra.mxu0 0.0
        %868 = vmatprep.subr.mxu0 0.0
        %869 = vmatpush1.msra.mxu0 0.0
        %870 = vmatprep.subr.mxu0 0.0
        %871 = vmatpush1.msra.mxu0 0.0
        %872 = vmatprep.subr.mxu0 0.0
        %873 = vmatpush1.msra.mxu0 0.0
        %874 = vmatprep.subr.mxu0 0.0
        %875 = vmatpush1.msra.mxu0 0.0
        %876 = vmatprep.subr.mxu0 0.0
        %877 = vmatpush1.msra.mxu0 0.0
        %878 = vmatprep.subr.mxu0 0.0
        %879 = vmatpush1.msra.mxu0 0.0
        %880 = vmatprep.subr.mxu0 0.0
        %881 = vmatpush1.msra.mxu0 0.0
        %882 = vmatprep.subr.mxu0 0.0
        %883 = vmatpush1.msra.mxu0 0.0
        %884 = vmatprep.subr.mxu0 0.0
        %885 = vmatpush1.msra.mxu0 0.0
        %886 = vmatprep.subr.mxu0 0.0
        %887 = vmatpush1.msra.mxu0 0.0
        %888 = vmatprep.subr.mxu0 0.0
        %889 = vmatpush1.msra.mxu0 0.0
        %890 = vmatprep.subr.mxu0 0.0
        %891 = vmatpush1.msra.mxu0 0.0
        %892 = vmatprep.subr.mxu0 0.0
        %893 = vmatpush1.msra.mxu0 0.0
        %894 = vmatprep.subr.mxu0 0.0
        %895 = vmatpush1.msra.mxu0 0.0
        %896 = vmatprep.subr.mxu0 0.0
        %897 = vmatpush1.msra.mxu0 0.0
        %898 = vmatprep.subr.mxu0 0.0
        %899 = vmatpush1.msra.mxu0 0.0
        %900 = vmatprep.subr.mxu0 0.0
        %901 = vmatpush1.msra.mxu0 0.0
        %902 = vmatprep.subr.mxu0 0.0
        %903 = vmatpush1.msra.mxu0 0.0
        %904 = vmatprep.subr.mxu0 0.0
        %905 = vmatpush1.msra.mxu0 0.0
        %906 = vmatprep.subr.mxu0 0.0
        %907 = vmatpush1.msra.mxu0 0.0
        %908 = vmatprep.subr.mxu0 0.0
        %909 = vmatpush1.msra.mxu0 0.0
        %910 = vmatprep.subr.mxu0 0.0
        %911 = vmatpush1.msra.mxu0 0.0
        %912 = vmatprep.subr.mxu0 0.0
        %913 = vmatpush1.msra.mxu0 0.0
        %914 = vmatprep.subr.mxu0 0.0
        %915 = vmatpush1.msra.mxu0 0.0
        %916 = vmatprep.subr.mxu0 0.0
        %917 = vmatpush1.msra.mxu0 0.0
        %918 = vmatprep.mubr.f32.mxu0 0.0
        %919 = vmatmul.mubr.f32.gmra.mrb[0].mxu0 %v849
        %v920 = vpop.f32.mrb[0].mxu0
        %v921 = vadd.f32 0.0, %v920
        %v922 = vpop.f32.mrb[0].mxu0
        %923 = vmatprep.mubr.f32.mxu0 0.0
        %924 = vmatmul.mubr.f32.gmra.mrb[0].mxu0 %v852
        %v925 = vpop.f32.mrb[0].mxu0
        %v926 = vadd.f32 0.0, %v925
        %v927 = vpop.f32.mrb[0].mxu0
        %928 = vdwg.mxu0
        %929 = vmatprep.subr.mxu0 0.0
        %930 = vmatpush1.msra.mxu0 %v839
        %931 = vmatprep.subr.mxu0 0.0
        %932 = vmatpush1.msra.mxu0 %v844
        %933 = vmatprep.subr.mxu0 0.0
        %934 = vmatpush1.msra.mxu0 0.0
        %935 = vmatprep.subr.mxu0 0.0
        %936 = vmatpush1.msra.mxu0 0.0
        %937 = vmatprep.subr.mxu0 0.0
        %938 = vmatpush1.msra.mxu0 0.0
        %939 = vmatprep.subr.mxu0 0.0
        %940 = vmatpush1.msra.mxu0 0.0
        %941 = vmatprep.subr.mxu0 0.0
        %942 = vmatpush1.msra.mxu0 0.0
        %943 = vmatprep.subr.mxu0 0.0
        %944 = vmatpush1.msra.mxu0 0.0
        %945 = vmatprep.subr.mxu0 0.0
        %946 = vmatpush1.msra.mxu0 0.0
        %947 = vmatprep.subr.mxu0 0.0
        %948 = vmatpush1.msra.mxu0 0.0
        %949 = vmatprep.subr.mxu0 0.0
        %950 = vmatpush1.msra.mxu0 0.0
        %951 = vmatprep.subr.mxu0 0.0
        %952 = vmatpush1.msra.mxu0 0.0
        %953 = vmatprep.subr.mxu0 0.0
        %954 = vmatpush1.msra.mxu0 0.0
        %955 = vmatprep.subr.mxu0 0.0
        %956 = vmatpush1.msra.mxu0 0.0
        %957 = vmatprep.subr.mxu0 0.0
        %958 = vmatpush1.msra.mxu0 0.0
        %959 = vmatprep.subr.mxu0 0.0
        %960 = vmatpush1.msra.mxu0 0.0
        %961 = vmatprep.subr.mxu0 0.0
        %962 = vmatpush1.msra.mxu0 0.0
        %963 = vmatprep.subr.mxu0 0.0
        %964 = vmatpush1.msra.mxu0 0.0
        %965 = vmatprep.subr.mxu0 0.0
        %966 = vmatpush1.msra.mxu0 0.0
        %967 = vmatprep.subr.mxu0 0.0
        %968 = vmatpush1.msra.mxu0 0.0
        %969 = vmatprep.subr.mxu0 0.0
        %970 = vmatpush1.msra.mxu0 0.0
        %971 = vmatprep.subr.mxu0 0.0
        %972 = vmatpush1.msra.mxu0 0.0
        %973 = vmatprep.subr.mxu0 0.0
        %974 = vmatpush1.msra.mxu0 0.0
        %975 = vmatprep.subr.mxu0 0.0
        %976 = vmatpush1.msra.mxu0 0.0
        %977 = vmatprep.subr.mxu0 0.0
        %978 = vmatpush1.msra.mxu0 0.0
        %979 = vmatprep.subr.mxu0 0.0
        %980 = vmatpush1.msra.mxu0 0.0
        %981 = vmatprep.subr.mxu0 0.0
        %982 = vmatpush1.msra.mxu0 0.0
        %983 = vmatprep.subr.mxu0 0.0
        %984 = vmatpush1.msra.mxu0 0.0
        %985 = vmatprep.subr.mxu0 0.0
        %986 = vmatpush1.msra.mxu0 0.0
        %987 = vmatprep.subr.mxu0 0.0
        %988 = vmatpush1.msra.mxu0 0.0
        %989 = vmatprep.subr.mxu0 0.0
        %990 = vmatpush1.msra.mxu0 0.0
        %991 = vmatprep.subr.mxu0 0.0
        %992 = vmatpush1.msra.mxu0 0.0
        %993 = vmatprep.mubr.f32.mxu0 0.0
        %994 = vmatmul.mubr.f32.gmra.mrb[0].mxu0 %v849
        %v995 = vpop.f32.mrb[0].mxu0
        %v996 = vadd.f32 0.0, %v995
        %v997 = vpop.f32.mrb[0].mxu0
        %998 = vmatprep.mubr.f32.mxu0 0.0
        %999 = vmatmul.mubr.f32.gmra.mrb[0].mxu0 %v852
        %v1000 = vpop.f32.mrb[0].mxu0
        %v1001 = vadd.f32 0.0, %v1000
        %v1002 = vpop.f32.mrb[0].mxu0
        %1003 = vdwg.mxu0
        %v1004 = vmul.f32 %v921, 0.001953125
        %v1005 = vmul.f32 %v926, 0.001953125
        %v1006 = vmul.f32 %v996, 0.001953125
        %v1007 = vmul.f32 %v1001, 0.001953125
        %v1008 = vmul.f32 %v1004, %v1004
        %v1009 = vmul.f32 %v1005, %v1005
        %v1010 = vsub.f32 %v1006, %v1008
        %v1011 = vsub.f32 %v1007, %v1009
        %v1012 = vmax.f32 %v1010, 0.0
        %v1013 = vmax.f32 %v1011, 0.0
        %v1014 = vadd.f32 %v1012, 1e-05
        %v1015 = vadd.f32 %v1013, 1e-05
        %v1016 = vrsqrt.pop %v1014
        %v1017 = vrsqrt.pop %v1015
        %v1018 = vld [vmem:[%s383] sm:$0xff]
        %v1019 = vld [vmem:[%s383 + $0x8] sm:$0xff]
        %v1020 = vmul.f32 %v1018, %v1016
        %v1021 = vmul.f32 %v1019, %v1017
        %v1022 = vld [vmem:[%s389] sm:$0xff]
        %v1023 = vld [vmem:[%s389 + $0x8] sm:$0xff]
        %v1024 = vmul.f32 %v1004, %v1020
        %v1025 = vmul.f32 %v1005, %v1021
        %v1026 = vsub.f32 %v1022, %v1024
        %v1027 = vsub.f32 %v1023, %v1025
        %1029 = vset.pattern.permute.xlu0 0
        %1030 = vperm.xlu0 %1029, %v1020
        %v1031 = vpop.permute.xlu0 %1030
        %1034 = vset.pattern.permute.xlu0 0
        %1035 = vperm.xlu0 %1034, %v1021
        %v1036 = vpop.permute.xlu0 %1035
        %v1038 = vmul.f32 %v812, %v1031
        %v1039 = vmul.f32 %v813, %v1031
        %v1040 = vmul.f32 %v814, %v1031
        %v1041 = vmul.f32 %v815, %v1036
        %v1042 = vmul.f32 %v816, %v1036
        %v1043 = vmul.f32 %v817, %v1036
        %1045 = vset.pattern.permute.xlu0 0
        %1046 = vperm.xlu0 %1045, %v1026
        %v1047 = vpop.permute.xlu0 %1046
        %1050 = vset.pattern.permute.xlu0 0
        %1051 = vperm.xlu0 %1050, %v1027
        %v1052 = vpop.permute.xlu0 %1051
        %v1054 = vadd.f32 %v1038, %v1047
        %v1055 = vadd.f32 %v1039, %v1047
        %v1056 = vadd.f32 %v1040, %v1047
        %v1057 = vadd.f32 %v1041, %v1052
        %v1058 = vadd.f32 %v1042, %v1052
        %v1059 = vadd.f32 %v1043, %v1052
        %v1060 = vmax.f32 %v1054, 0.0
        %v1061 = vmax.f32 %v1055, 0.0
        %v1062 = vmax.f32 %v1056, 0.0
        %v1063 = vmax.f32 %v1057, 0.0
        %v1064 = vmax.f32 %v1058, 0.0
        %v1065 = vmax.f32 %v1059, 0.0
        %1066 = vst [vmem:[%s372] sm:$0xff] %v1060
        %1067 = vst [vmem:[%s372 + $0x8] sm:$0xff] %v1061
        %1068 = vst.msk [vmem:[%s372 + $0x10] sm:$0xff] %vm819, %v1062
        %1069 = vst [vmem:[%s372 + $0x18] sm:$0xff] %v1063
        %1070 = vst [vmem:[%s372 + $0x20] sm:$0xff] %v1064
        %1071 = vst.msk [vmem:[%s372 + $0x28] sm:$0xff] %vm819, %v1065
        %s1072 = sand.u32 %s188, 1
        %s1073 = scalar_lea.sflag [#allocation4], %s1072
        %s1074 = sand.u32 %s188, 1
        %s1075 = smul.addr %s1074, 48
        %s1076 = scalar_lea.vmem [#allocation3], %s1075
        // Predicated region
        $region86: #{tpu_custom_call.1} parent=80 // pred_check
          %p1077 = pneg %p198
        $region87: #{tpu_custom_call.1} parent=80 // pred_check_branch
          %1079 = sbr.rel (%p1077) target = $region89
        $region88: #{tpu_custom_call.1} parent=80 // pred_region
          %s1080 = smul.u32 2, %s25
          %s1082 = ssub.s32 768, 768
          %1083 = vsyncadd %s1073, %s1082
          %s1084 = smul.addr %s1080, 3
          %s1085 = smul.addr %s24, 12
          %s1086 = sadd.s32 %s1084, %s1085
          %s1087 = smul.addr %s1086, 128
          %s1088 = scalar_lea.hbm %s6, %s1087
          %s1089 = sshll.u32 %s1076, 4
          %s1090 = int_to_ptr.vmem [resolvable:$true] %s1089
          %1095 = dma.vmem_to_hbm [thread:$0]  %s1090, 768, %s1088, %s1073, 384, 384, 24
        $region89: #{tpu_custom_call.1} parent=80 // pred_fallthru
          _
      $region81: #{tpu_custom_call.1} parent=5 // pred_fallthru
        _
      %p1096 = scmp.le.s32.totalorder 2, %s15
      // Predicated region
      $region90: #{tpu_custom_call.1} parent=5 // pred_check
        %p1097 = pneg %p1096
      $region91: #{tpu_custom_call.1} parent=5 // pred_check_branch
        %1099 = sbr.rel (%p1097) target = $region93
      $region92: #{tpu_custom_call.1} parent=5 // pred_region
        %s1100 = ssub.s32 %s15, 2
        // Predicated region
        $region94: #{tpu_custom_call.1} parent=92 // pred_check
          %p1101 = pneg %p204
        $region95: #{tpu_custom_call.1} parent=92 // pred_check_branch
          %1103 = sbr.rel (%p1101) target = $region97
        $region96: #{tpu_custom_call.1} parent=92 // pred_region
          %s1104 = sand.u32 %s189, 1
          %s1105 = scalar_lea.sflag [#allocation4], %s1104
          %s1106 = sand.u32 %s189, 1
          %s1107 = smul.addr %s1106, 48
          %s1108 = scalar_lea.vmem [#allocation3], %s1107
          %1109 = dma.done %s1105, 768
        $region97: #{tpu_custom_call.1} parent=92 // pred_fallthru
          _
      $region93: #{tpu_custom_call.1} parent=5 // pred_fallthru
        _
    $region6: #{tpu_custom_call.1} parent=1 // loop_footer
      %s19 = sadd.s32 1, %s15
    $region7: #{tpu_custom_call.1} parent=1 // loop_footer_branch
      %14 = sbr.rel target = $region3
    $region8: #{tpu_custom_call.1} parent=1 // loop_exit
      _
    %1110 = vsyncpa [#allocation4], 1
    %s1111 = scalar_lea.sflag [#allocation4], 1
    %1112 = vsyncpa %s1111, 1

</llo_original>
